<compile_context>
chip_gen: v7x
topology: tpu7x:2x2x1
jax: 0.10.0
libtpu: 0.0.40
codegen_flags: <defaults>
</compile_context>

<pallas_src>
import functools

import jax
import jax.numpy as jnp
from jax import lax
from jax.experimental import pallas as pl
from jax.experimental.pallas import tpu as pltpu


def _round_up(x, m):
    return ((x + m - 1) // m) * m


def _vmem_limit_bytes():
    """Generation-aware VMEM request (v5e/v6e: 128 MiB phys, v7x: 64 MiB)."""
    try:
        cap = int(pltpu.get_tpu_info().vmem_capacity_bytes)
    except Exception:
        cap = 64 * 1024 * 1024  # conservative fallback (v7x-sized)
    return max(32 * 1024 * 1024, min((cap * 3) // 4, 100 * 1024 * 1024))


# --------------------------- QKV projection kernel ---------------------------
def _qkv_proj_kernel(x_ref, w_ref, b_ref, q_ref, k_ref, v_ref, *,
                     d_pad, scale, mxu_dtype):
    x = x_ref[...].astype(mxu_dtype)          # W is pre-cast to mxu_dtype
    # One wide GEMM: (tile, d_pad) @ (d_pad, 3*d_pad) -> (tile, 3*d_pad), f32 acc.
    y = jnp.dot(x, w_ref[...], preferred_element_type=jnp.float32) + b_ref[...]
    # Fold the attention scale into q (N*D multiplies instead of N*N later).
    q_ref[...] = (y[:, :d_pad] * scale).astype(q_ref.dtype)
    k_ref[...] = y[:, d_pad:2 * d_pad].astype(k_ref.dtype)
    v_ref[...] = y[:, 2 * d_pad:].astype(v_ref.dtype)


# ------------------- Flash attention kernel (streaming grid) -----------------
def _flash_attn_stream_kernel(q_ref, k_ref, v_ref, bias_ref, o_ref,
                              m_sc, l_sc, acc_sc, *, mxu_dtype):
    ki = pl.program_id(1)

    @pl.when(ki == 0)
    def _():
        m_sc[...] = jnp.full_like(m_sc, -1e30)
        l_sc[...] = jnp.zeros_like(l_sc)
        acc_sc[...] = jnp.zeros_like(acc_sc)

    q = q_ref[...]                            # already mxu_dtype, pre-scaled
    k = k_ref[...]
    # QK^T contracting both last dims (no in-VMEM k.T through the XLU).
    s = lax.dot_general(q, k, dimension_numbers=(((1,), (1,)), ((), ())),
                        preferred_element_type=jnp.float32)
    s = s + bias_ref[...]                     # (1, tk) key-padding bias (0 / -1e30)

    m_prev = m_sc[...]
    m_new = jnp.maximum(m_prev, jnp.max(s, axis=1, keepdims=True))
    alpha = jnp.exp(m_prev - m_new)
    p = jnp.exp(s - m_new)
    l_sc[...] = alpha * l_sc[...] + jnp.sum(p, axis=1, keepdims=True)
    acc_sc[...] = alpha * acc_sc[...] + jnp.dot(
        p.astype(mxu_dtype), v_ref[...], preferred_element_type=jnp.float32)
    m_sc[...] = m_new

    @pl.when(ki == pl.num_programs(1) - 1)
    def _():
        # Exact normalization: runs once per query block, essentially free.
        o_ref[...] = (acc_sc[...] * (1.0 / l_sc[...])).astype(o_ref.dtype)


# ------------------- Flash attention kernel (KV resident in VMEM) ------------
def _flash_attn_resident_kernel(q_ref, k_ref, v_ref, bias_ref, o_ref, *,
                                tk, n_kv_chunks, mxu_dtype):
    tq, d_pad = q_ref.shape
    q = q_ref[...]                            # already mxu_dtype, pre-scaled

    def body(c, carry):
        m_prev, l_prev, acc_prev = carry
        off = pl.multiple_of(c * tk, tk)
        k = k_ref[pl.ds(off, tk), :]
        v = v_ref[pl.ds(off, tk), :]
        b = bias_ref[pl.ds(c, 1), :]          # (1, tk) key-padding bias
        s = lax.dot_general(q, k, dimension_numbers=(((1,), (1,)), ((), ())),
                            preferred_element_type=jnp.float32) + b
        m_new = jnp.maximum(m_prev, jnp.max(s, axis=1, keepdims=True))
        alpha = jnp.exp(m_prev - m_new)
        p = jnp.exp(s - m_new)
        l_new = alpha * l_prev + jnp.sum(p, axis=1, keepdims=True)
        acc_new = alpha * acc_prev + jnp.dot(
            p.astype(mxu_dtype), v, preferred_element_type=jnp.float32)
        return m_new, l_new, acc_new

    m0 = jnp.full((tq, 1), -1e30, jnp.float32)
    l0 = jnp.zeros((tq, 1), jnp.float32)
    a0 = jnp.zeros((tq, d_pad), jnp.float32)
    _, l, acc = lax.fori_loop(0, n_kv_chunks, body, (m0, l0, a0))
    o_ref[...] = (acc * (1.0 / l)).astype(o_ref.dtype)


# --------------------------------- Wrapper -----------------------------------
def flash_attention_forward(x, wq, bq, wk, bk, wv, bv, *, embed_dim,
                            mxu_dtype=jnp.bfloat16):
    """x: (N, D) f32. w*: (D, D) nn.Linear layout (out, in). b*: (D,).

    mxu_dtype=bf16 (default) runs the MXU at bf16 rate; accumulation and
    softmax statistics stay f32.
    """
    n, d = x.shape
    assert d == embed_dim
    scale = float(embed_dim) ** -0.5

    # Lane-dense padding of the embed dim.
    d_pad = _round_up(d, 128)

    # Row tiles (rounded to 16 so bf16 blocks respect the (16,128) min tile).
    if n >= 1024:
        tq = 1024
    elif n >= 512:
        tq = 512
    else:
        tq = _round_up(n, 16)
    n_pad = _round_up(n, tq)
    tk = 512 if n_pad >= 512 else n_pad
    n_q_blocks = n_pad // tq
    n_kv_chunks = n_pad // tk

    tile1 = 512 if n_pad >= 512 else n_pad          # stage-1 row tile (HBM-bound)
    n1_blocks = n_pad // tile1

    vmem_cap = _vmem_limit_bytes()

    x_p = jnp.pad(x, ((0, n_pad - n), (0, d_pad - d)))

    def pad_wt(w):  # (out, in) -> padded (in_pad, out_pad)
        return jnp.pad(w.T, ((0, d_pad - d), (0, d_pad - d)))

    w_qkv = jnp.concatenate([pad_wt(wq), pad_wt(wk), pad_wt(wv)],
                            axis=1).astype(mxu_dtype)
    b_qkv = jnp.concatenate(
        [jnp.pad(b, (0, d_pad - d)) for b in (bq, bk, bv)]
    ).reshape(1, 3 * d_pad).astype(jnp.float32)

    # Additive key-padding bias: 0 for valid keys, -1e30 for padded key rows.
    key_idx = jnp.arange(n_pad, dtype=jnp.int32)
    bias_flat = jnp.where(key_idx < n, 0.0, -1e30).astype(jnp.float32)

    # ---- Stage 1: fused QKV projection (bf16 outputs, scale folded into q) ----
    proj_kernel = functools.partial(_qkv_proj_kernel, d_pad=d_pad, scale=scale,
                                    mxu_dtype=mxu_dtype)
    q_p, k_p, v_p = pl.pallas_call(
        proj_kernel,
        out_shape=tuple(jax.ShapeDtypeStruct((n_pad, d_pad), mxu_dtype)
                        for _ in range(3)),
        grid_spec=pltpu.PrefetchScalarGridSpec(
            num_scalar_prefetch=0,
            grid=(n1_blocks,),
            in_specs=[
                pl.BlockSpec((tile1, d_pad), lambda i: (i, 0)),        # x rows
                pl.BlockSpec((d_pad, 3 * d_pad), lambda i: (0, 0)),    # W resident
                pl.BlockSpec((1, 3 * d_pad), lambda i: (0, 0)),        # bias resident
            ],
            out_specs=(
                pl.BlockSpec((tile1, d_pad), lambda i: (i, 0)),
                pl.BlockSpec((tile1, d_pad), lambda i: (i, 0)),
                pl.BlockSpec((tile1, d_pad), lambda i: (i, 0)),
            ),
        ),
        compiler_params=pltpu.CompilerParams(
            dimension_semantics=("parallel",),    # sharded across TCs on v7x
            vmem_limit_bytes=vmem_cap,
        ),
    )(x_p, w_qkv, b_qkv)

    # ---- Stage 2: flash attention — pick KV-resident vs streaming layout ----
    itm = jnp.dtype(mxu_dtype).itemsize
    kv_resident_bytes = 2 * 2 * n_pad * d_pad * itm       # K+V, double-buffered
    overhead = (2 * tq * d_pad * itm                        # q double-buffered
                + 2 * tq * d_pad * 4                        # out double-buffered
                + tq * d_pad * 4                            # f32 accumulator
                + 3 * tq * tk * 4                           # s / p temporaries
                + (2 << 20))
    use_resident = (kv_resident_bytes + overhead) <= int(0.7 * vmem_cap)

    if use_resident:
        # K/V/bias DMA'd once (constant index_map), kv loop inside the kernel.
        attn_kernel = functools.partial(
            _flash_attn_resident_kernel, tk=tk, n_kv_chunks=n_kv_chunks,
            mxu_dtype=mxu_dtype)
        bias2d = bias_flat.reshape(n_kv_chunks, tk)
        o_p = pl.pallas_call(
            attn_kernel,
            out_shape=jax.ShapeDtypeStruct((n_pad, d_pad), x.dtype),
            grid_spec=pltpu.PrefetchScalarGridSpec(
                num_scalar_prefetch=0,
                grid=(n_q_blocks,),
                in_specs=[
                    pl.BlockSpec((tq, d_pad), lambda qi: (qi, 0)),          # q
                    pl.BlockSpec((n_pad, d_pad), lambda qi: (0, 0)),        # K resident
                    pl.BlockSpec((n_pad, d_pad), lambda qi: (0, 0)),        # V resident
                    pl.BlockSpec((n_kv_chunks, tk), lambda qi: (0, 0)),     # bias
                ],
                out_specs=pl.BlockSpec((tq, d_pad), lambda qi: (qi, 0)),
            ),
            compiler_params=pltpu.CompilerParams(
                dimension_semantics=("parallel",),
                vmem_limit_bytes=vmem_cap,
            ),
        )(q_p, k_p, v_p, bias2d)
    else:
        # Streaming 2-D grid; output block resident across the kv axis.
        attn_kernel = functools.partial(_flash_attn_stream_kernel,
                                        mxu_dtype=mxu_dtype)
        bias_row = bias_flat.reshape(1, n_pad)
        o_p = pl.pallas_call(
            attn_kernel,
            out_shape=jax.ShapeDtypeStruct((n_pad, d_pad), x.dtype),
            grid_spec=pltpu.PrefetchScalarGridSpec(
                num_scalar_prefetch=0,
                grid=(n_q_blocks, n_kv_chunks),
                in_specs=[
                    pl.BlockSpec((tq, d_pad), lambda qi, ki: (qi, 0)),  # q
                    pl.BlockSpec((tk, d_pad), lambda qi, ki: (ki, 0)),  # k
                    pl.BlockSpec((tk, d_pad), lambda qi, ki: (ki, 0)),  # v
                    pl.BlockSpec((1, tk), lambda qi, ki: (0, ki)),      # bias
                ],
                out_specs=pl.BlockSpec((tq, d_pad), lambda qi, ki: (qi, 0)),
                scratch_shapes=[
                    pltpu.VMEM((tq, 1), jnp.float32),      # running max
                    pltpu.VMEM((tq, 1), jnp.float32),      # running denom
                    pltpu.VMEM((tq, d_pad), jnp.float32),  # accumulator
                ],
            ),
            compiler_params=pltpu.CompilerParams(
                dimension_semantics=("parallel", "arbitrary"),
                vmem_limit_bytes=vmem_cap,
            ),
        )(q_p, k_p, v_p, bias_row)

    return o_p[:n, :d]


# ---------------------------------- Test -------------------------------------
def _init_linear(key, in_dim, out_dim):
    """Deterministic init mimicking nn.Linear default (uniform +/- 1/sqrt(in))."""
    kw, kb = jax.random.split(key)
    bound = 1.0 / (in_dim ** 0.5)
    w = jax.random.uniform(kw, (out_dim, in_dim), jnp.float32, -bound, bound)
    b = jax.random.uniform(kb, (out_dim,), jnp.float32, -bound, bound)
    return w, b


def _reference(x, wq, bq, wk, bk, wv, bv, embed_dim):
    q = x @ wq.T + bq
    k = x @ wk.T + bk
    v = x @ wv.T + bv
    s = (q @ k.T) * (embed_dim ** -0.5)
    p = jax.nn.softmax(s, axis=1)
    return p @ v


if __name__ == "__main__":
    embed_dim = 32
    block_size = 4   # only used by the (disabled) flash code path in the reference
    seq_len = 8      # number of rows in x

    key = jax.random.PRNGKey(0)
    kx, kq, kk, kv = jax.random.split(key, 4)

    x = jax.random.normal(kx, (seq_len, embed_dim), jnp.float32)
    wq, bq = _init_linear(kq, embed_dim, embed_dim)
    wk, bk = _init_linear(kk, embed_dim, embed_dim)
    wv, bv = _init_linear(kv, embed_dim, embed_dim)

    out = flash_attention_forward(x, wq, bq, wk, bk, wv, bv, embed_dim=embed_dim)
    out = jax.block_until_ready(out)

    ref = _reference(x, wq, bq, wk, bk, wv, bv, embed_dim)
    assert out.shape == (seq_len, embed_dim)
    # Tolerance reflects bf16 MXU inputs (f32 accumulation / softmax stats).
    assert jnp.allclose(out, ref, atol=2e-2, rtol=2e-2), "mismatch vs JAX reference"

    print("KERNEL_OK")
</pallas_src>

<mosaic_0001>
module attributes {stable_mosaic.version = 11 : i64} {
  func.func @_qkv_proj_kernel(%arg0: i32, %arg1: memref<16x128xf32, #tpu.memory_space<vmem>>, %arg2: memref<128x384xbf16, #tpu.memory_space<vmem>>, %arg3: memref<1x384xf32, #tpu.memory_space<vmem>>, %arg4: memref<16x128xbf16, #tpu.memory_space<vmem>>, %arg5: memref<16x128xbf16, #tpu.memory_space<vmem>>, %arg6: memref<16x128xbf16, #tpu.memory_space<vmem>>) attributes {dimension_semantics = [#tpu.dimension_semantics<parallel>], iteration_bounds = array<i64: 1>, scalar_prefetch = 0 : i64, scratch_operands = 0 : i64, tpu.core_type = #tpu.core_type<tc>, window_params = [{transform_indices = @transform_0, window_bounds = array<i64: 16, 128>}, {pipeline_mode = #tpu.pipeline_mode<synchronous>, transform_indices = @transform_1, window_bounds = array<i64: 128, 384>}, {pipeline_mode = #tpu.pipeline_mode<synchronous>, transform_indices = @transform_2, window_bounds = array<i64: 1, 384>}, {transform_indices = @transform_3, window_bounds = array<i64: 16, 128>}, {transform_indices = @transform_4, window_bounds = array<i64: 16, 128>}, {transform_indices = @transform_5, window_bounds = array<i64: 16, 128>}]} {
    %c0 = arith.constant 0 : index
    %c0_0 = arith.constant 0 : index
    %0 = vector.load %arg1[%c0, %c0_0] : memref<16x128xf32, #tpu.memory_space<vmem>>, vector<16x128xf32>
    %1 = arith.truncf %0 : vector<16x128xf32> to vector<16x128xbf16>
    %c0_1 = arith.constant 0 : index
    %c0_2 = arith.constant 0 : index
    %2 = vector.load %arg2[%c0_1, %c0_2] : memref<128x384xbf16, #tpu.memory_space<vmem>>, vector<128x384xbf16>
    %cst = arith.constant dense<0.000000e+00> : vector<16x384xf32>
    %3 = tpu.matmul %1, %2, %cst {dimension_numbers = #tpu.dot_dimension_numbers<[1], [0], [0], [1], [0, 0, 1, 1], [], []>} : vector<16x128xbf16>, vector<128x384xbf16>, vector<16x384xf32> -> vector<16x384xf32>
    %c0_3 = arith.constant 0 : index
    %c0_4 = arith.constant 0 : index
    %4 = vector.load %arg3[%c0_3, %c0_4] : memref<1x384xf32, #tpu.memory_space<vmem>>, vector<1x384xf32>
    %5 = vector.broadcast %4 : vector<1x384xf32> to vector<16x384xf32>
    %6 = arith.addf %3, %5 : vector<16x384xf32>
    %7 = vector.extract_strided_slice %6 {offsets = [0, 0], sizes = [16, 128], strides = [1, 1]} : vector<16x384xf32> to vector<16x128xf32>
    %cst_5 = arith.constant 0.176776692 : f32
    %8 = vector.broadcast %cst_5 : f32 to vector<16x128xf32>
    %9 = arith.mulf %7, %8 : vector<16x128xf32>
    %10 = arith.truncf %9 : vector<16x128xf32> to vector<16x128xbf16>
    %c0_6 = arith.constant 0 : index
    %c0_7 = arith.constant 0 : index
    %11 = vector.load %arg4[%c0_6, %c0_7] : memref<16x128xbf16, #tpu.memory_space<vmem>>, vector<16x128xbf16>
    tpu.vector_store %arg4[%c0_6, %c0_7], %10 {strides = array<i32>} : memref<16x128xbf16, #tpu.memory_space<vmem>>, vector<16x128xbf16>,
    %12 = vector.extract_strided_slice %6 {offsets = [0, 128], sizes = [16, 128], strides = [1, 1]} : vector<16x384xf32> to vector<16x128xf32>
    %13 = arith.truncf %12 : vector<16x128xf32> to vector<16x128xbf16>
    %c0_8 = arith.constant 0 : index
    %c0_9 = arith.constant 0 : index
    %14 = vector.load %arg5[%c0_8, %c0_9] : memref<16x128xbf16, #tpu.memory_space<vmem>>, vector<16x128xbf16>
    tpu.vector_store %arg5[%c0_8, %c0_9], %13 {strides = array<i32>} : memref<16x128xbf16, #tpu.memory_space<vmem>>, vector<16x128xbf16>,
    %15 = vector.extract_strided_slice %6 {offsets = [0, 256], sizes = [16, 128], strides = [1, 1]} : vector<16x384xf32> to vector<16x128xf32>
    %16 = arith.truncf %15 : vector<16x128xf32> to vector<16x128xbf16>
    %c0_10 = arith.constant 0 : index
    %c0_11 = arith.constant 0 : index
    %17 = vector.load %arg6[%c0_10, %c0_11] : memref<16x128xbf16, #tpu.memory_space<vmem>>, vector<16x128xbf16>
    tpu.vector_store %arg6[%c0_10, %c0_11], %16 {strides = array<i32>} : memref<16x128xbf16, #tpu.memory_space<vmem>>, vector<16x128xbf16>,
    return
  }
  func.func @transform_0(%arg0: i32) -> (i32, i32) {
    %c0_i32 = arith.constant 0 : i32
    %c0_i32_0 = arith.constant 0 : i32
    return %arg0, %c0_i32 : i32, i32
  }
  func.func @transform_1(%arg0: i32) -> (i32, i32) {
    %c0_i32 = arith.constant 0 : i32
    %c0_i32_0 = arith.constant 0 : i32
    %c0_i32_1 = arith.constant 0 : i32
    return %c0_i32, %c0_i32_0 : i32, i32
  }
  func.func @transform_2(%arg0: i32) -> (i32, i32) {
    %c0_i32 = arith.constant 0 : i32
    %c0_i32_0 = arith.constant 0 : i32
    %c0_i32_1 = arith.constant 0 : i32
    return %c0_i32, %c0_i32_0 : i32, i32
  }
  func.func @transform_3(%arg0: i32) -> (i32, i32) {
    %c0_i32 = arith.constant 0 : i32
    %c0_i32_0 = arith.constant 0 : i32
    return %arg0, %c0_i32 : i32, i32
  }
  func.func @transform_4(%arg0: i32) -> (i32, i32) {
    %c0_i32 = arith.constant 0 : i32
    %c0_i32_0 = arith.constant 0 : i32
    return %arg0, %c0_i32 : i32, i32
  }
  func.func @transform_5(%arg0: i32) -> (i32, i32) {
    %c0_i32 = arith.constant 0 : i32
    %c0_i32_0 = arith.constant 0 : i32
    return %arg0, %c0_i32 : i32, i32
  }
}

</mosaic_0001>

<llo_original>
// kernel: tpu_custom_call.1
$region0: #{tpu_custom_call.1}
  #allocation0 [shape = 'u32[]', space=smem, size = 0x4, offset = 0x4, fixed_abs, tag = 'smem constant byte address 0x4 - core index']
  #allocation1 [shape = 'u32[144,128]{1,0:T(1,128)}', space=vmem, size = 0x12000, scoped, tag = 'internal scratch']
  %s0 = inlined_call_operand.hbm [shape: f32[16,128], index: 0, kind: input, shape index: {}]
  %s1 = inlined_call_operand.hbm [shape: bf16[128,384], index: 1, kind: input, shape index: {}]
  %s2 = inlined_call_operand.vmem [shape: f32[1,384], index: 2, kind: input, shape index: {}]
  %s3 = inlined_call_operand.hbm [shape: bf16[16,128], index: 3, kind: output, shape index: {0}]
  %s4 = inlined_call_operand.hbm [shape: bf16[16,128], index: 4, kind: output, shape index: {1}]
  %s5 = inlined_call_operand.hbm [shape: bf16[16,128], index: 5, kind: output, shape index: {2}]
  %6 = xla_tuple %s3, %s4, %s5
  %s7 = sld [smem:[#allocation0]]
  $region46: #{tpu_custom_call.1} parent=0
    _
  %s9 = ssub.s32 1, %s7
  %s10 = scalar_select 0, %s9, %s7
  $region1: #{tpu_custom_call.1} parent=0
    #allocation2 [shape = 'u8[8192]{0}', space=vmem, size = 0x2000, scoped, tag = 'input window, operand 0, single buffered']
    #allocation3 [shape = 's32[1]{0}', space=sflag, size = 0x4, scoped, tag = 'scoped memory for tpu_custom_call.1']
    #allocation4 [shape = 's32[1]{0}', space=sflag, size = 0x4, scoped, tag = 'scoped memory for tpu_custom_call.1']
    #allocation5 [shape = 'u8[98304]{0}', space=vmem, size = 0x18000, scoped, tag = 'input window, operand 1, single buffered']
    #allocation6 [shape = 's32[1]{0}', space=sflag, size = 0x4, scoped, tag = 'scoped memory for tpu_custom_call.1']
    #allocation7 [shape = 'u8[4096]{0}', space=vmem, size = 0x1000, scoped, tag = 'output window, operand 0, single buffered']
    #allocation8 [shape = 'u8[4096]{0}', space=vmem, size = 0x1000, scoped, tag = 'output window, operand 1, single buffered']
    #allocation9 [shape = 's32[1]{0}', space=sflag, size = 0x4, scoped, tag = 'scoped memory for tpu_custom_call.1']
    #allocation10 [shape = 'u8[4096]{0}', space=vmem, size = 0x1000, scoped, tag = 'output window, operand 2, single buffered']
    %11 = vsyncpa [#allocation3], 0
    %12 = vsyncpa [#allocation6], 0
    %13 = vsyncpa [#allocation4], 0
    %14 = vsyncpa [#allocation9], 0
    // Predicated region
    $region2: #{tpu_custom_call.1} parent=1 // pred_check
      _
    $region3: #{tpu_custom_call.1} parent=1 // pred_check_branch
      %16 = sbr.rel (0) target = $region5
    $region4: #{tpu_custom_call.1} parent=1 // pred_region
      %s18 = ssub.s32 256, 256
      %19 = vsyncadd [#allocation3], %s18
      %s20 = sshll.u32 [#allocation2], 4
      %s21 = int_to_ptr.vmem [resolvable:$true] %s20
      %26 = dma.hbm_to_vmem [thread:$0]  %s0, 256, %s21, [#allocation3], 128, 128, 8
    $region5: #{tpu_custom_call.1} parent=1 // pred_fallthru
      _
    // Predicated region
    $region6: #{tpu_custom_call.1} parent=1 // pred_check
      _
    $region7: #{tpu_custom_call.1} parent=1 // pred_check_branch
      %28 = sbr.rel (0) target = $region9
    $region8: #{tpu_custom_call.1} parent=1 // pred_region
      %s30 = ssub.s32 3072, 3072
      %31 = vsyncadd [#allocation6], %s30
      %s32 = sshll.u32 [#allocation5], 4
      %s33 = int_to_ptr.vmem [resolvable:$true] %s32
      %38 = dma.hbm_to_vmem [thread:$0]  %s1, 3072, %s33, [#allocation6], 192, 192, 12
    $region9: #{tpu_custom_call.1} parent=1 // pred_fallthru
      _
    // Predicated region
    $region10: #{tpu_custom_call.1} parent=1 // pred_check
      _
    $region11: #{tpu_custom_call.1} parent=1 // pred_check_branch
      %40 = sbr.rel (0) target = $region13
    $region12: #{tpu_custom_call.1} parent=1 // pred_region
      _
    $region13: #{tpu_custom_call.1} parent=1 // pred_fallthru
      _
    // Predicated region
    $region14: #{tpu_custom_call.1} parent=1 // pred_check
      _
    $region15: #{tpu_custom_call.1} parent=1 // pred_check_branch
      %42 = sbr.rel (0) target = $region17
    $region16: #{tpu_custom_call.1} parent=1 // pred_region
      %43 = dma.done [#allocation3], 256
    $region17: #{tpu_custom_call.1} parent=1 // pred_fallthru
      _
    // Predicated region
    $region18: #{tpu_custom_call.1} parent=1 // pred_check
      _
    $region19: #{tpu_custom_call.1} parent=1 // pred_check_branch
      %45 = sbr.rel (0) target = $region21
    $region20: #{tpu_custom_call.1} parent=1 // pred_region
      %46 = dma.done [#allocation6], 3072
    $region21: #{tpu_custom_call.1} parent=1 // pred_fallthru
      _
    %v48 = vld [vmem:[#allocation2] sm:$0xff]
    %v49 = vld [vmem:[#allocation2 + $0x8] sm:$0xff]
    %v50 = vpack.c.bf16 %v49, %v48
    %v51 = vld [vmem:[#allocation5] sm:$0xff]
    %v52 = vld [vmem:[#allocation5 + $0x8] sm:$0xf]
    %v53 = vld [vmem:[#allocation5 + $0xc] sm:$0xff]
    %v54 = vld [vmem:[#allocation5 + $0x14] sm:$0xf]
    %v55 = vld [vmem:[#allocation5 + $0x18] sm:$0xff]
    %v56 = vld [vmem:[#allocation5 + $0x20] sm:$0xf]
    %v57 = vld [vmem:[#allocation5 + $0x24] sm:$0xff]
    %v58 = vld [vmem:[#allocation5 + $0x2c] sm:$0xf]
    %v59 = vld [vmem:[#allocation5 + $0x30] sm:$0xff]
    %v60 = vld [vmem:[#allocation5 + $0x38] sm:$0xf]
    %v61 = vld [vmem:[#allocation5 + $0x3c] sm:$0xff]
    %v62 = vld [vmem:[#allocation5 + $0x44] sm:$0xf]
    %v63 = vld [vmem:[#allocation5 + $0x48] sm:$0xff]
    %v64 = vld [vmem:[#allocation5 + $0x50] sm:$0xf]
    %v65 = vld [vmem:[#allocation5 + $0x54] sm:$0xff]
    %v66 = vld [vmem:[#allocation5 + $0x5c] sm:$0xf]
    %v67 = vld [vmem:[#allocation5 + $0x60] sm:$0xff]
    %v68 = vld [vmem:[#allocation5 + $0x68] sm:$0xf]
    %v69 = vld [vmem:[#allocation5 + $0x6c] sm:$0xff]
    %v70 = vld [vmem:[#allocation5 + $0x74] sm:$0xf]
    %v71 = vld [vmem:[#allocation5 + $0x78] sm:$0xff]
    %v72 = vld [vmem:[#allocation5 + $0x80] sm:$0xf]
    %v73 = vld [vmem:[#allocation5 + $0x84] sm:$0xff]
    %v74 = vld [vmem:[#allocation5 + $0x8c] sm:$0xf]
    %v75 = vld [vmem:[#allocation5 + $0x90] sm:$0xff]
    %v76 = vld [vmem:[#allocation5 + $0x98] sm:$0xf]
    %v77 = vld [vmem:[#allocation5 + $0x9c] sm:$0xff]
    %v78 = vld [vmem:[#allocation5 + $0xa4] sm:$0xf]
    %v79 = vld [vmem:[#allocation5 + $0xa8] sm:$0xff]
    %v80 = vld [vmem:[#allocation5 + $0xb0] sm:$0xf]
    %v81 = vld [vmem:[#allocation5 + $0xb4] sm:$0xff]
    %v82 = vld [vmem:[#allocation5 + $0xbc] sm:$0xf]
    %v83 = vld [vmem:[%s2] sm:$0x7]
    %v85 = vlaneseq
    %v86 = vshrl.u32 %v85, 7
    %v87 = vsub.s32 0, %v86
    %v88 = vrot.slane %v83, %v87
    %v89 = vlaneseq
    %v90 = vshrl.u32 %v89, 7
    %v91 = vsub.s32 1, %v90
    %v92 = vrot.slane %v83, %v91
    %v93 = vlaneseq
    %v94 = vshrl.u32 %v93, 7
    %v95 = vsub.s32 2, %v94
    %v96 = vrot.slane %v83, %v95
    %v132 = vunpack.c.l.b16 %v51
    %v133 = vunpack.c.h.b16 %v51
    %v134 = vunpack.c.l.b16 %v52
    %v135 = vunpack.c.l.b16 %v53
    %v136 = vunpack.c.h.b16 %v53
    %v137 = vunpack.c.l.b16 %v54
    %v138 = vunpack.c.l.b16 %v55
    %v139 = vunpack.c.h.b16 %v55
    %v140 = vunpack.c.l.b16 %v56
    %v141 = vunpack.c.l.b16 %v57
    %v142 = vunpack.c.h.b16 %v57
    %v143 = vunpack.c.l.b16 %v58
    %v144 = vunpack.c.l.b16 %v59
    %v145 = vunpack.c.h.b16 %v59
    %v146 = vunpack.c.l.b16 %v60
    %v147 = vunpack.c.l.b16 %v61
    %v148 = vunpack.c.h.b16 %v61
    %v149 = vunpack.c.l.b16 %v62
    %v150 = vunpack.c.l.b16 %v63
    %v151 = vunpack.c.h.b16 %v63
    %v152 = vunpack.c.l.b16 %v64
    %v153 = vunpack.c.l.b16 %v65
    %v154 = vunpack.c.h.b16 %v65
    %v155 = vunpack.c.l.b16 %v66
    %v156 = vunpack.c.l.b16 %v67
    %v157 = vunpack.c.h.b16 %v67
    %v158 = vunpack.c.l.b16 %v68
    %v159 = vunpack.c.l.b16 %v69
    %v160 = vunpack.c.h.b16 %v69
    %v161 = vunpack.c.l.b16 %v70
    %v162 = vunpack.c.l.b16 %v71
    %v163 = vunpack.c.h.b16 %v71
    %v164 = vunpack.c.l.b16 %v72
    %v165 = vunpack.c.l.b16 %v73
    %v166 = vunpack.c.h.b16 %v73
    %v167 = vunpack.c.l.b16 %v74
    %v168 = vunpack.c.l.b16 %v75
    %v169 = vunpack.c.h.b16 %v75
    %v170 = vunpack.c.l.b16 %v76
    %v171 = vunpack.c.l.b16 %v77
    %v172 = vunpack.c.h.b16 %v77
    %v173 = vunpack.c.l.b16 %v78
    %v174 = vunpack.c.l.b16 %v79
    %v175 = vunpack.c.h.b16 %v79
    %v176 = vunpack.c.l.b16 %v80
    %v177 = vunpack.c.l.b16 %v81
    %v178 = vunpack.c.h.b16 %v81
    %v179 = vunpack.c.l.b16 %v82
    %v180 = vpack.c.b16 %v135, %v132
    %v181 = vpack.c.b16 %v136, %v133
    %v182 = vpack.c.b16 %v137, %v134
    %v183 = vpack.c.b16 %v141, %v138
    %v184 = vpack.c.b16 %v142, %v139
    %v185 = vpack.c.b16 %v143, %v140
    %v186 = vpack.c.b16 %v147, %v144
    %v187 = vpack.c.b16 %v148, %v145
    %v188 = vpack.c.b16 %v149, %v146
    %v189 = vpack.c.b16 %v153, %v150
    %v190 = vpack.c.b16 %v154, %v151
    %v191 = vpack.c.b16 %v155, %v152
    %v192 = vpack.c.b16 %v159, %v156
    %v193 = vpack.c.b16 %v160, %v157
    %v194 = vpack.c.b16 %v161, %v158
    %v195 = vpack.c.b16 %v165, %v162
    %v196 = vpack.c.b16 %v166, %v163
    %v197 = vpack.c.b16 %v167, %v164
    %v198 = vpack.c.b16 %v171, %v168
    %v199 = vpack.c.b16 %v172, %v169
    %v200 = vpack.c.b16 %v173, %v170
    %v201 = vpack.c.b16 %v177, %v174
    %v202 = vpack.c.b16 %v178, %v175
    %v203 = vpack.c.b16 %v179, %v176
    %228 = vmatprep.subr.bf16.mxu0 %v181
    %229 = vmatpush1.bf16.msra.mxu0 %v180
    %230 = vmatprep.subr.bf16.mxu0 %v184
    %231 = vmatpush1.bf16.msra.mxu0 %v183
    %232 = vmatprep.subr.bf16.mxu0 %v187
    %233 = vmatpush1.bf16.msra.mxu0 %v186
    %234 = vmatprep.subr.bf16.mxu0 %v190
    %235 = vmatpush1.bf16.msra.mxu0 %v189
    %236 = vmatprep.subr.bf16.mxu0 %v193
    %237 = vmatpush1.bf16.msra.mxu0 %v192
    %238 = vmatprep.subr.bf16.mxu0 %v196
    %239 = vmatpush1.bf16.msra.mxu0 %v195
    %240 = vmatprep.subr.bf16.mxu0 %v199
    %241 = vmatpush1.bf16.msra.mxu0 %v198
    %242 = vmatprep.subr.bf16.mxu0 %v202
    %243 = vmatpush1.bf16.msra.mxu0 %v201
    %244 = vmatprep.subr.bf16.mxu0 0
    %245 = vmatpush1.bf16.msra.mxu0 0
    %246 = vmatprep.subr.bf16.mxu0 0
    %247 = vmatpush1.bf16.msra.mxu0 0
    %248 = vmatprep.subr.bf16.mxu0 0
    %249 = vmatpush1.bf16.msra.mxu0 0
    %250 = vmatprep.subr.bf16.mxu0 0
    %251 = vmatpush1.bf16.msra.mxu0 0
    %252 = vmatprep.subr.bf16.mxu0 0
    %253 = vmatpush1.bf16.msra.mxu0 0
    %254 = vmatprep.subr.bf16.mxu0 0
    %255 = vmatpush1.bf16.msra.mxu0 0
    %256 = vmatprep.subr.bf16.mxu0 0
    %257 = vmatpush1.bf16.msra.mxu0 0
    %258 = vmatprep.subr.bf16.mxu0 0
    %259 = vmatpush1.bf16.msra.mxu0 0
    %260 = vmatprep.mubr.bf16.mxu0 0
    %261 = vmatmul.mubr.bf16.gmra.mrb[0].mxu0 %v50
    %v262 = vpop.f32.mrb[0].mxu0
    %v263 = vadd.f32 %v88, %v262
    %v264 = vpop.f32.mrb[0].mxu0
    %v265 = vadd.f32 %v92, %v264
    %v266 = vpop.f32.mrb[0].mxu0
    %v267 = vadd.f32 %v88, %v266
    %v268 = vpop.f32.mrb[0].mxu0
    %v269 = vadd.f32 %v92, %v268
    %270 = vdwg.mxu0
    %271 = vmatprep.subr.bf16.mxu0 0
    %272 = vmatpush1.bf16.msra.mxu0 %v182
    %273 = vmatprep.subr.bf16.mxu0 0
    %274 = vmatpush1.bf16.msra.mxu0 %v185
    %275 = vmatprep.subr.bf16.mxu0 0
    %276 = vmatpush1.bf16.msra.mxu0 %v188
    %277 = vmatprep.subr.bf16.mxu0 0
    %278 = vmatpush1.bf16.msra.mxu0 %v191
    %279 = vmatprep.subr.bf16.mxu0 0
    %280 = vmatpush1.bf16.msra.mxu0 %v194
    %281 = vmatprep.subr.bf16.mxu0 0
    %282 = vmatpush1.bf16.msra.mxu0 %v197
    %283 = vmatprep.subr.bf16.mxu0 0
    %284 = vmatpush1.bf16.msra.mxu0 %v200
    %285 = vmatprep.subr.bf16.mxu0 0
    %286 = vmatpush1.bf16.msra.mxu0 %v203
    %287 = vmatprep.subr.bf16.mxu0 0
    %288 = vmatpush1.bf16.msra.mxu0 0
    %289 = vmatprep.subr.bf16.mxu0 0
    %290 = vmatpush1.bf16.msra.mxu0 0
    %291 = vmatprep.subr.bf16.mxu0 0
    %292 = vmatpush1.bf16.msra.mxu0 0
    %293 = vmatprep.subr.bf16.mxu0 0
    %294 = vmatpush1.bf16.msra.mxu0 0
    %295 = vmatprep.subr.bf16.mxu0 0
    %296 = vmatpush1.bf16.msra.mxu0 0
    %297 = vmatprep.subr.bf16.mxu0 0
    %298 = vmatpush1.bf16.msra.mxu0 0
    %299 = vmatprep.subr.bf16.mxu0 0
    %300 = vmatpush1.bf16.msra.mxu0 0
    %301 = vmatprep.subr.bf16.mxu0 0
    %302 = vmatpush1.bf16.msra.mxu0 0
    %303 = vmatprep.mubr.bf16.mxu0 0
    %304 = vmatmul.mubr.bf16.gmra.mrb[0].mxu0 %v50
    %v305 = vpop.f32.mrb[0].mxu0
    %v306 = vadd.f32 %v96, %v305
    %v307 = vpop.f32.mrb[0].mxu0
    %v308 = vpop.f32.mrb[0].mxu0
    %v309 = vadd.f32 %v96, %v308
    %v310 = vpop.f32.mrb[0].mxu0
    %311 = vdwg.mxu0
    %v312 = vmul.f32 %v263, 0.17677669
    %v313 = vmul.f32 %v267, 0.17677669
    %v314 = vpack.c.bf16 %v313, %v312
    %v316 = vunpack.c.l.b16 %v314
    %v317 = vunpack.c.h.b16 %v314
    %v318 = vpack.c.b16 %v316, %v316
    %v319 = vpack.c.b16 %v317, %v317
    %322 = vst [vmem:[#allocation7] sm:$0xf] %v318
    %323 = vst [vmem:[#allocation7 + $0x4] sm:$0xf] %v319
    %v324 = vpack.c.bf16 %v269, %v265
    %v326 = vunpack.c.l.b16 %v324
    %v327 = vunpack.c.h.b16 %v324
    %v328 = vpack.c.b16 %v326, %v326
    %v329 = vpack.c.b16 %v327, %v327
    %332 = vst [vmem:[#allocation8] sm:$0xf] %v328
    %333 = vst [vmem:[#allocation8 + $0x4] sm:$0xf] %v329
    %v334 = vpack.c.bf16 %v309, %v306
    %v336 = vunpack.c.l.b16 %v334
    %v337 = vunpack.c.h.b16 %v334
    %v338 = vpack.c.b16 %v336, %v336
    %v339 = vpack.c.b16 %v337, %v337
    %342 = vst [vmem:[#allocation10] sm:$0xf] %v338
    %343 = vst [vmem:[#allocation10 + $0x4] sm:$0xf] %v339
    // Predicated region
    $region22: #{tpu_custom_call.1} parent=1 // pred_check
      _
    $region23: #{tpu_custom_call.1} parent=1 // pred_check_branch
      %345 = sbr.rel (0) target = $region25
    $region24: #{tpu_custom_call.1} parent=1 // pred_region
      %s347 = ssub.s32 128, 128
      %348 = vsyncadd [#allocation4], %s347
      %s349 = sshll.u32 [#allocation7], 4
      %s350 = int_to_ptr.vmem [resolvable:$true] %s349
      %355 = dma.vmem_to_hbm [thread:$0]  %s350, 128, %s3, [#allocation4], 64, 64, 4
    $region25: #{tpu_custom_call.1} parent=1 // pred_fallthru
      _
    // Predicated region
    $region26: #{tpu_custom_call.1} parent=1 // pred_check
      _
    $region27: #{tpu_custom_call.1} parent=1 // pred_check_branch
      %357 = sbr.rel (0) target = $region29
    $region28: #{tpu_custom_call.1} parent=1 // pred_region
      %s359 = ssub.s32 128, 128
      %360 = vsyncadd [#allocation9], %s359
      %s361 = sshll.u32 [#allocation8], 4
      %s362 = int_to_ptr.vmem [resolvable:$true] %s361
      %367 = dma.vmem_to_hbm [thread:$0]  %s362, 128, %s4, [#allocation9], 64, 64, 4
    $region29: #{tpu_custom_call.1} parent=1 // pred_fallthru
      _
    // Predicated region
    $region30: #{tpu_custom_call.1} parent=1 // pred_check
      _
    $region31: #{tpu_custom_call.1} parent=1 // pred_check_branch
      %369 = sbr.rel (0) target = $region33
    $region32: #{tpu_custom_call.1} parent=1 // pred_region
      %s371 = ssub.s32 128, 128
      %372 = vsyncadd [#allocation9], %s371
      %s373 = sshll.u32 [#allocation10], 4
      %s374 = int_to_ptr.vmem [resolvable:$true] %s373
      %379 = dma.vmem_to_hbm [thread:$0]  %s374, 128, %s5, [#allocation9], 64, 64, 4
    $region33: #{tpu_custom_call.1} parent=1 // pred_fallthru
      _
    // Predicated region
    $region34: #{tpu_custom_call.1} parent=1 // pred_check
      _
    $region35: #{tpu_custom_call.1} parent=1 // pred_check_branch
      %381 = sbr.rel (0) target = $region37
    $region36: #{tpu_custom_call.1} parent=1 // pred_region
      %382 = dma.done [#allocation4], 128
    $region37: #{tpu_custom_call.1} parent=1 // pred_fallthru
      _
    // Predicated region
    $region38: #{tpu_custom_call.1} parent=1 // pred_check
      _
    $region39: #{tpu_custom_call.1} parent=1 // pred_check_branch
      %384 = sbr.rel (0) target = $region41
    $region40: #{tpu_custom_call.1} parent=1 // pred_region
      %385 = dma.done [#allocation9], 128
    $region41: #{tpu_custom_call.1} parent=1 // pred_fallthru
      _
    // Predicated region
    $region42: #{tpu_custom_call.1} parent=1 // pred_check
      _
    $region43: #{tpu_custom_call.1} parent=1 // pred_check_branch
      %387 = sbr.rel (0) target = $region45
    $region44: #{tpu_custom_call.1} parent=1 // pred_region
      %388 = dma.done [#allocation9], 128
    $region45: #{tpu_custom_call.1} parent=1 // pred_fallthru
      _
    %389 = vsyncpa [#allocation3], 1
    %390 = vsyncpa [#allocation6], 1
    %391 = vsyncpa [#allocation4], 1
    %392 = vsyncpa [#allocation9], 1

</llo_original>
